<compile_context>
chip_gen: v6e
topology: v6e:2x2x1
jax: 0.10.0
libtpu: 0.0.40
codegen_flags: <defaults>
</compile_context>

<pallas_src>
import math
import jax
import jax.numpy as jnp
from jax.experimental import pallas as pl
from jax.experimental.pallas import tpu as pltpu

NEG_SLOPE = 0.01       # nn.LeakyReLU default negative_slope
_TILE_MAX = 2048       # max rows per grid step
_VMEM_TILE_BUDGET = 24 << 20   # per-step working-set budget used to cap the tile


def _round_up(x, m):
    return ((x + m - 1) // m) * m


def _lane(n):
    return _round_up(n, 128)


def _leaky_relu(z):
    # mul + max (2 VPU ops) instead of cmp + mul + select (3 ops).
    return jnp.maximum(z, NEG_SLOPE * z)


def decoder_kernel(x_ref, w1_ref, b1_ref, w2_ref, b2_ref, o_ref):
    # Dropout(p=0) == identity, elided.
    # Layer 1: Linear(latent -> hidden) + LeakyReLU.
    # Matmul operands cast to the weight dtype (bf16 by default) => guaranteed
    # single-pass MXU on v5e/v6e/v7x; accumulation stays f32.
    x = x_ref[...].astype(w1_ref.dtype)
    z1 = jnp.dot(x, w1_ref[...], preferred_element_type=jnp.float32)
    h = _leaky_relu(z1 + b1_ref[0, :])            # (1,N) bias -> sublane bcast

    # Layer 2: Linear(hidden -> feature) + LeakyReLU.
    z2 = jnp.dot(h.astype(w2_ref.dtype), w2_ref[...],
                 preferred_element_type=jnp.float32)
    y = _leaky_relu(z2 + b2_ref[0, :])
    o_ref[...] = y.astype(o_ref.dtype)


def decoder_forward(x, w1, b1, w2, b2, *, batch_tile=None, out_dtype=None,
                    compute_dtype=jnp.bfloat16, vmem_limit_bytes=None):
    B, latent = x.shape
    hidden = w1.shape[1]
    feature = w2.shape[1]
    if out_dtype is None:
        # Matches the PyTorch module (f32 in -> f32 out).  On v5e, prefer
        # out_dtype=jnp.bfloat16: the output write dominates HBM traffic.
        out_dtype = x.dtype
    out_isz = jnp.dtype(out_dtype).itemsize
    cmp_isz = jnp.dtype(compute_dtype).itemsize

    # Matmul operands in compute_dtype (bf16 default), biases kept f32.
    w1c = w1.astype(compute_dtype)
    w2c = w2.astype(compute_dtype)
    b1c = b1.astype(jnp.float32).reshape(1, hidden)
    b2c = b2.astype(jnp.float32).reshape(1, feature)

    # --- batch tiling --------------------------------------------------------
    # Per-row VMEM footprint (lane-padded, double-buffered I/O + f32 temps).
    per_row = (2 * _lane(latent) * x.dtype.itemsize        # x tile (2-buf)
               + 2 * _lane(feature) * out_isz               # out tile (2-buf)
               + _lane(hidden) * 4                          # h intermediate
               + _lane(feature) * 4)                        # f32 layer-2 result
    tile_cap = max(8, (_VMEM_TILE_BUDGET // per_row) // 8 * 8)

    if batch_tile is None:
        if B > 16:
            # >= 2 grid steps so both v7x TensorCores get work ("parallel").
            batch_tile = min(_TILE_MAX, tile_cap, _round_up(pl.cdiv(B, 2), 8))
        else:
            batch_tile = _round_up(max(B, 8), 8)
    batch_tile = max(8, _round_up(batch_tile, 8))
    grid = (pl.cdiv(B, batch_tile),)
    # No wrapper-side pad/slice: Pallas clips the ragged edge block; rows past
    # B are computed on don't-care data and their stores are masked.

    # --- VMEM budget (tight, with headroom; cap well under v7x's 64 MiB) -----
    if vmem_limit_bytes is None:
        weight_bytes = 2 * cmp_isz * (_round_up(latent, 8) * _lane(hidden)
                                      + _round_up(hidden, 8) * _lane(feature))
        bias_bytes = 2 * 4 * (_lane(hidden) + _lane(feature))
        per_step = batch_tile * per_row + weight_bytes + bias_bytes
        vmem_limit_bytes = int(min(max(2 * per_step, 8 << 20), 32 << 20))

    flops = 2 * B * (latent * hidden + hidden * feature)
    bytes_accessed = (
        x.size * x.dtype.itemsize
        + B * feature * out_isz
        + w1c.size * cmp_isz + w2c.size * cmp_isz
        + b1c.size * 4 + b2c.size * 4
    )

    return pl.pallas_call(
        decoder_kernel,
        out_shape=jax.ShapeDtypeStruct((B, feature), out_dtype),
        grid_spec=pltpu.PrefetchScalarGridSpec(
            num_scalar_prefetch=0,
            grid=grid,
            in_specs=[
                pl.BlockSpec((batch_tile, latent), lambda i: (i, 0)),  # x tile
                pl.BlockSpec((latent, hidden), lambda i: (0, 0)),      # W1
                pl.BlockSpec((1, hidden), lambda i: (0, 0)),           # b1
                pl.BlockSpec((hidden, feature), lambda i: (0, 0)),     # W2
                pl.BlockSpec((1, feature), lambda i: (0, 0)),          # b2
            ],
            out_specs=pl.BlockSpec((batch_tile, feature), lambda i: (i, 0)),
        ),
        compiler_params=pltpu.CompilerParams(
            dimension_semantics=("parallel",),
            vmem_limit_bytes=vmem_limit_bytes,
        ),
        cost_estimate=pl.CostEstimate(
            flops=flops, transcendentals=0, bytes_accessed=bytes_accessed),
    )(x, w1c, b1c, w2c, b2c)


def init_linear_params(key, in_features, out_features):
    """Deterministic init mimicking nn.Linear defaults (kaiming-uniform-ish)."""
    kw, kb = jax.random.split(key)
    bound = 1.0 / math.sqrt(in_features)
    # Stored as [in, out] so the kernel does x @ W.
    w = jax.random.uniform(kw, (in_features, out_features),
                           minval=-bound, maxval=bound, dtype=jnp.float32)
    b = jax.random.uniform(kb, (1, out_features),
                           minval=-bound, maxval=bound, dtype=jnp.float32)
    return w, b


def reference_forward(x, w1, b1, w2, b2):
    h = jax.nn.leaky_relu(x @ w1 + b1, NEG_SLOPE)
    return jax.nn.leaky_relu(h @ w2 + b2, NEG_SLOPE)


if __name__ == "__main__":
    # Module defaults: latent_dimensions=16, layer_sizes=(128,), feature_size=784.
    latent, hidden, feature = 16, 128, 784

    key = jax.random.PRNGKey(0)
    kx1, kx2, kx3, k1, k2 = jax.random.split(key, 5)
    w1, b1 = init_linear_params(k1, latent, hidden)
    w2, b2 = init_linear_params(k2, hidden, feature)

    # 1) Small batch, f32 compute path: tight match against reference.
    x1 = jax.random.normal(kx1, (8, latent), dtype=jnp.float32)
    out1 = jax.block_until_ready(
        decoder_forward(x1, w1, b1, w2, b2, compute_dtype=jnp.float32))
    ref1 = reference_forward(x1, w1, b1, w2, b2)
    assert out1.shape == (8, feature)
    assert jnp.allclose(out1, ref1, atol=1e-5, rtol=1e-5), "f32 mismatch vs reference"

    # 2) Ragged batch (not a tile multiple), default bf16-operand path,
    #    default tile selection (>= 2 grid steps, edge block clipped by Pallas).
    x2 = jax.random.normal(kx2, (100, latent), dtype=jnp.float32)
    out2 = jax.block_until_ready(decoder_forward(x2, w1, b1, w2, b2))
    ref2 = reference_forward(x2, w1, b1, w2, b2)
    assert out2.shape == (100, feature)
    assert jnp.allclose(out2, ref2, atol=5e-2, rtol=5e-2), "bf16 mismatch (default path)"

    # 3) Explicit small tile + bf16 output (recommended setting on v5e).
    x3 = jax.random.normal(kx3, (200, latent), dtype=jnp.float32)
    out3 = jax.block_until_ready(
        decoder_forward(x3, w1, b1, w2, b2, batch_tile=64,
                        out_dtype=jnp.bfloat16))
    ref3 = reference_forward(x3, w1, b1, w2, b2)
    assert out3.shape == (200, feature)
    assert jnp.allclose(out3.astype(jnp.float32), ref3, atol=5e-2, rtol=5e-2), \
        "bf16-out mismatch vs reference"

    print("KERNEL_OK")
</pallas_src>

<mosaic_0001>
module attributes {stable_mosaic.version = 11 : i64} {
  func.func @decoder_kernel(%arg0: i32, %arg1: memref<8x16xf32, #tpu.memory_space<vmem>>, %arg2: memref<16x128xf32, #tpu.memory_space<vmem>>, %arg3: memref<1x128xf32, #tpu.memory_space<vmem>>, %arg4: memref<128x784xf32, #tpu.memory_space<vmem>>, %arg5: memref<1x784xf32, #tpu.memory_space<vmem>>, %arg6: memref<8x784xf32, #tpu.memory_space<vmem>>) attributes {dimension_semantics = [#tpu.dimension_semantics<parallel>], iteration_bounds = array<i64: 1>, scalar_prefetch = 0 : i64, scratch_operands = 0 : i64, tpu.core_type = #tpu.core_type<tc>, window_params = [{transform_indices = @transform_0, window_bounds = array<i64: 8, 16>}, {pipeline_mode = #tpu.pipeline_mode<synchronous>, transform_indices = @transform_1, window_bounds = array<i64: 16, 128>}, {pipeline_mode = #tpu.pipeline_mode<synchronous>, transform_indices = @transform_2, window_bounds = array<i64: 1, 128>}, {pipeline_mode = #tpu.pipeline_mode<synchronous>, transform_indices = @transform_3, window_bounds = array<i64: 128, 784>}, {pipeline_mode = #tpu.pipeline_mode<synchronous>, transform_indices = @transform_4, window_bounds = array<i64: 1, 784>}, {transform_indices = @transform_5, window_bounds = array<i64: 8, 784>}]} {
    %c0 = arith.constant 0 : index
    %c0_0 = arith.constant 0 : index
    %0 = vector.load %arg1[%c0, %c0_0] : memref<8x16xf32, #tpu.memory_space<vmem>>, vector<8x16xf32>
    %c0_1 = arith.constant 0 : index
    %c0_2 = arith.constant 0 : index
    %1 = vector.load %arg2[%c0_1, %c0_2] : memref<16x128xf32, #tpu.memory_space<vmem>>, vector<16x128xf32>
    %cst = arith.constant dense<0.000000e+00> : vector<8x128xf32>
    %2 = tpu.matmul %0, %1, %cst {dimension_numbers = #tpu.dot_dimension_numbers<[1], [0], [0], [1], [0, 0, 1, 1], [], []>} : vector<8x16xf32>, vector<16x128xf32>, vector<8x128xf32> -> vector<8x128xf32>
    %c0_3 = arith.constant 0 : index
    %c0_4 = arith.constant 0 : index
    %3 = vector.load %arg3[%c0_3, %c0_4] : memref<1x128xf32, #tpu.memory_space<vmem>>, vector<1x128xf32>
    %4 = vector.shape_cast %3 : vector<1x128xf32> to vector<128xf32>
    %5 = vector.shape_cast %4 : vector<128xf32> to vector<1x128xf32>
    %6 = vector.broadcast %5 : vector<1x128xf32> to vector<8x128xf32>
    %7 = arith.addf %2, %6 : vector<8x128xf32>
    %cst_5 = arith.constant 0.00999999977 : f32
    %8 = vector.broadcast %cst_5 : f32 to vector<8x128xf32>
    %9 = arith.mulf %8, %7 : vector<8x128xf32>
    %10 = arith.maximumf %7, %9 : vector<8x128xf32>
    %c0_6 = arith.constant 0 : index
    %c0_7 = arith.constant 0 : index
    %11 = vector.load %arg4[%c0_6, %c0_7] : memref<128x784xf32, #tpu.memory_space<vmem>>, vector<128x784xf32>
    %cst_8 = arith.constant dense<0.000000e+00> : vector<8x784xf32>
    %12 = tpu.matmul %10, %11, %cst_8 {dimension_numbers = #tpu.dot_dimension_numbers<[1], [0], [0], [1], [0, 0, 1, 1], [], []>} : vector<8x128xf32>, vector<128x784xf32>, vector<8x784xf32> -> vector<8x784xf32>
    %c0_9 = arith.constant 0 : index
    %c0_10 = arith.constant 0 : index
    %13 = vector.load %arg5[%c0_9, %c0_10] : memref<1x784xf32, #tpu.memory_space<vmem>>, vector<1x784xf32>
    %14 = vector.shape_cast %13 : vector<1x784xf32> to vector<784xf32>
    %15 = vector.shape_cast %14 : vector<784xf32> to vector<1x784xf32>
    %16 = vector.broadcast %15 : vector<1x784xf32> to vector<8x784xf32>
    %17 = arith.addf %12, %16 : vector<8x784xf32>
    %cst_11 = arith.constant 0.00999999977 : f32
    %18 = vector.broadcast %cst_11 : f32 to vector<8x784xf32>
    %19 = arith.mulf %18, %17 : vector<8x784xf32>
    %20 = arith.maximumf %17, %19 : vector<8x784xf32>
    %c0_12 = arith.constant 0 : index
    %c0_13 = arith.constant 0 : index
    %21 = vector.load %arg6[%c0_12, %c0_13] : memref<8x784xf32, #tpu.memory_space<vmem>>, vector<8x784xf32>
    tpu.vector_store %arg6[%c0_12, %c0_13], %20 {strides = array<i32>} : memref<8x784xf32, #tpu.memory_space<vmem>>, vector<8x784xf32>,
    return
  }
  func.func @transform_0(%arg0: i32) -> (i32, i32) {
    %c0_i32 = arith.constant 0 : i32
    %c0_i32_0 = arith.constant 0 : i32
    return %arg0, %c0_i32 : i32, i32
  }
  func.func @transform_1(%arg0: i32) -> (i32, i32) {
    %c0_i32 = arith.constant 0 : i32
    %c0_i32_0 = arith.constant 0 : i32
    %c0_i32_1 = arith.constant 0 : i32
    return %c0_i32, %c0_i32_0 : i32, i32
  }
  func.func @transform_2(%arg0: i32) -> (i32, i32) {
    %c0_i32 = arith.constant 0 : i32
    %c0_i32_0 = arith.constant 0 : i32
    %c0_i32_1 = arith.constant 0 : i32
    return %c0_i32, %c0_i32_0 : i32, i32
  }
  func.func @transform_3(%arg0: i32) -> (i32, i32) {
    %c0_i32 = arith.constant 0 : i32
    %c0_i32_0 = arith.constant 0 : i32
    %c0_i32_1 = arith.constant 0 : i32
    return %c0_i32, %c0_i32_0 : i32, i32
  }
  func.func @transform_4(%arg0: i32) -> (i32, i32) {
    %c0_i32 = arith.constant 0 : i32
    %c0_i32_0 = arith.constant 0 : i32
    %c0_i32_1 = arith.constant 0 : i32
    return %c0_i32, %c0_i32_0 : i32, i32
  }
  func.func @transform_5(%arg0: i32) -> (i32, i32) {
    %c0_i32 = arith.constant 0 : i32
    %c0_i32_0 = arith.constant 0 : i32
    return %arg0, %c0_i32 : i32, i32
  }
}

</mosaic_0001>

<llo_original>
// kernel: tpu_custom_call.1
$region0: #{tpu_custom_call.1}
  #allocation0 [shape = 'u32[]', space=smem, size = 0x4, offset = 0x4, fixed_abs, tag = 'smem constant byte address 0x4 - core index']
  #allocation1 [shape = 'u32[144,128]{1,0:T(1,128)}', space=vmem, size = 0x12000, scoped, tag = 'internal scratch']
  %s0 = inlined_call_operand.vmem [shape: f32[8,16], index: 0, kind: input, shape index: {}]
  %s1 = inlined_call_operand.vmem [shape: f32[16,128], index: 1, kind: input, shape index: {}]
  %s2 = inlined_call_operand.vmem [shape: f32[1,128], index: 2, kind: input, shape index: {}]
  %s3 = inlined_call_operand.vmem [shape: f32[128,784], index: 3, kind: input, shape index: {}]
  %s4 = inlined_call_operand.vmem [shape: f32[1,784], index: 4, kind: input, shape index: {}]
  %s5 = inlined_call_operand.hbm [shape: f32[8,784], index: 5, kind: output, shape index: {}]
  %s6 = sld [smem:[#allocation0]]
  $region30: #{tpu_custom_call.1} parent=0
    _
  %s8 = ssub.s32 1, %s6
  %s9 = scalar_select 0, %s8, %s6
  $region1: #{tpu_custom_call.1} parent=0
    #allocation2 [shape = 'u8[28672]{0}', space=vmem, size = 0x7000, scoped, tag = 'output window, operand 0, single buffered']
    #allocation3 [shape = 's32[1]{0}', space=sflag, size = 0x4, scoped, tag = 'scoped memory for tpu_custom_call.1']
    %10 = vsyncpa [#allocation3], 0
    // Predicated region
    $region2: #{tpu_custom_call.1} parent=1 // pred_check
      _
    $region3: #{tpu_custom_call.1} parent=1 // pred_check_branch
      %12 = sbr.rel (0) target = $region5
    $region4: #{tpu_custom_call.1} parent=1 // pred_region
      _
    $region5: #{tpu_custom_call.1} parent=1 // pred_fallthru
      _
    // Predicated region
    $region6: #{tpu_custom_call.1} parent=1 // pred_check
      _
    $region7: #{tpu_custom_call.1} parent=1 // pred_check_branch
      %14 = sbr.rel (0) target = $region9
    $region8: #{tpu_custom_call.1} parent=1 // pred_region
      _
    $region9: #{tpu_custom_call.1} parent=1 // pred_fallthru
      _
    // Predicated region
    $region10: #{tpu_custom_call.1} parent=1 // pred_check
      _
    $region11: #{tpu_custom_call.1} parent=1 // pred_check_branch
      %16 = sbr.rel (0) target = $region13
    $region12: #{tpu_custom_call.1} parent=1 // pred_region
      _
    $region13: #{tpu_custom_call.1} parent=1 // pred_fallthru
      _
    // Predicated region
    $region14: #{tpu_custom_call.1} parent=1 // pred_check
      _
    $region15: #{tpu_custom_call.1} parent=1 // pred_check_branch
      %18 = sbr.rel (0) target = $region17
    $region16: #{tpu_custom_call.1} parent=1 // pred_region
      _
    $region17: #{tpu_custom_call.1} parent=1 // pred_fallthru
      _
    // Predicated region
    $region18: #{tpu_custom_call.1} parent=1 // pred_check
      _
    $region19: #{tpu_custom_call.1} parent=1 // pred_check_branch
      %20 = sbr.rel (0) target = $region21
    $region20: #{tpu_custom_call.1} parent=1 // pred_region
      _
    $region21: #{tpu_custom_call.1} parent=1 // pred_fallthru
      _
    %v21 = vld [vmem:[%s0] sm:$0xff]
    %v22 = vld [vmem:[%s1] sm:$0xff]
    %v23 = vld [vmem:[%s1 + $0x8] sm:$0xff]
    %v24 = vld [vmem:[%s2] sm:$0x1]
    %v26 = vlaneseq
    %v27 = vshrl.u32 %v26, 7
    %v28 = vsub.s32 0, %v27
    %v29 = vrot.slane %v24, %v28
    %vm31 = vcmask 130048
    %v33 = vsel %vm31, %v21, 0
    %35 = vmatprep.subr.mxu0 0.0
    %36 = vmatpush1.msra.mxu0 0.0
    %37 = vmatprep.subr.mxu0 0.0
    %38 = vmatpush1.msra.mxu0 0.0
    %39 = vmatprep.subr.mxu0 0.0
    %40 = vmatpush1.msra.mxu0 0.0
    %41 = vmatprep.subr.mxu0 0.0
    %42 = vmatpush1.msra.mxu0 0.0
    %43 = vmatprep.subr.mxu0 0.0
    %44 = vmatpush1.msra.mxu0 0.0
    %45 = vmatprep.subr.mxu0 0.0
    %46 = vmatpush1.msra.mxu0 0.0
    %47 = vmatprep.subr.mxu0 0.0
    %48 = vmatpush1.msra.mxu0 0.0
    %49 = vmatprep.subr.mxu0 0.0
    %50 = vmatpush1.msra.mxu0 0.0
    %51 = vmatprep.subr.mxu0 0.0
    %52 = vmatpush1.msra.mxu0 0.0
    %53 = vmatprep.subr.mxu0 0.0
    %54 = vmatpush1.msra.mxu0 0.0
    %55 = vmatprep.subr.mxu0 0.0
    %56 = vmatpush1.msra.mxu0 0.0
    %57 = vmatprep.subr.mxu0 0.0
    %58 = vmatpush1.msra.mxu0 0.0
    %59 = vmatprep.subr.mxu0 0.0
    %60 = vmatpush1.msra.mxu0 0.0
    %61 = vmatprep.subr.mxu0 0.0
    %62 = vmatpush1.msra.mxu0 0.0
    %63 = vmatprep.subr.mxu0 0.0
    %64 = vmatpush1.msra.mxu0 %v23
    %65 = vmatprep.subr.mxu0 0.0
    %66 = vmatpush1.msra.mxu0 %v22
    %67 = vmatprep.subr.mxu0 0.0
    %68 = vmatpush2.msra.mxu0 0.0
    %69 = vmatprep.subr.mxu0 0.0
    %70 = vmatpush2.msra.mxu0 0.0
    %71 = vmatprep.subr.mxu0 0.0
    %72 = vmatpush2.msra.mxu0 0.0
    %73 = vmatprep.subr.mxu0 0.0
    %74 = vmatpush2.msra.mxu0 0.0
    %75 = vmatprep.subr.mxu0 0.0
    %76 = vmatpush2.msra.mxu0 0.0
    %77 = vmatprep.subr.mxu0 0.0
    %78 = vmatpush2.msra.mxu0 0.0
    %79 = vmatprep.subr.mxu0 0.0
    %80 = vmatpush2.msra.mxu0 0.0
    %81 = vmatprep.subr.mxu0 0.0
    %82 = vmatpush2.msra.mxu0 0.0
    %83 = vmatprep.subr.mxu0 0.0
    %84 = vmatpush2.msra.mxu0 0.0
    %85 = vmatprep.subr.mxu0 0.0
    %86 = vmatpush2.msra.mxu0 0.0
    %87 = vmatprep.subr.mxu0 0.0
    %88 = vmatpush2.msra.mxu0 0.0
    %89 = vmatprep.subr.mxu0 0.0
    %90 = vmatpush2.msra.mxu0 0.0
    %91 = vmatprep.subr.mxu0 0.0
    %92 = vmatpush2.msra.mxu0 0.0
    %93 = vmatprep.subr.mxu0 0.0
    %94 = vmatpush2.msra.mxu0 0.0
    %95 = vmatprep.subr.mxu0 0.0
    %96 = vmatpush2.msra.mxu0 0.0
    %97 = vmatprep.subr.mxu0 0.0
    %98 = vmatpush2.msra.mxu0 0.0
    %99 = vmatprep.mubr.f32.mxu0 0.0
    %100 = vmatmul.mubr.f32.gmra.mxu0 %v33
    %v101 = vpop.f32.mrf.mxu0
    %v102 = vadd.f32 %v29, %v101
    %v103 = vpop.f32.mrf.mxu0
    %104 = vdwg.mxu0
    %v105 = vmul.f32 %v102, 0.01
    %v106 = vmax.f32 %v102, %v105
    %v107 = vld [vmem:[%s3] sm:$0xff]
    %v108 = vld [vmem:[%s3 + $0x8] sm:$0xff]
    %v109 = vld [vmem:[%s3 + $0x10] sm:$0xff]
    %v110 = vld [vmem:[%s3 + $0x18] sm:$0xff]
    %v111 = vld [vmem:[%s3 + $0x20] sm:$0xff]
    %v112 = vld [vmem:[%s3 + $0x28] sm:$0xff]
    %v113 = vld [vmem:[%s3 + $0x30] sm:$0xff]
    %v114 = vld [vmem:[%s3 + $0x38] sm:$0xff]
    %v115 = vld [vmem:[%s3 + $0x40] sm:$0xff]
    %v116 = vld [vmem:[%s3 + $0x48] sm:$0xff]
    %v117 = vld [vmem:[%s3 + $0x50] sm:$0xff]
    %v118 = vld [vmem:[%s3 + $0x58] sm:$0xff]
    %v119 = vld [vmem:[%s3 + $0x60] sm:$0xff]
    %v120 = vld [vmem:[%s3 + $0x68] sm:$0xff]
    %v121 = vld [vmem:[%s3 + $0x70] sm:$0xff]
    %v122 = vld [vmem:[%s3 + $0x78] sm:$0xff]
    %v123 = vld [vmem:[%s3 + $0x80] sm:$0xff]
    %v124 = vld [vmem:[%s3 + $0x88] sm:$0xff]
    %v125 = vld [vmem:[%s3 + $0x90] sm:$0xff]
    %v126 = vld [vmem:[%s3 + $0x98] sm:$0xff]
    %v127 = vld [vmem:[%s3 + $0xa0] sm:$0xff]
    %v128 = vld [vmem:[%s3 + $0xa8] sm:$0xff]
    %v129 = vld [vmem:[%s3 + $0xb0] sm:$0xff]
    %v130 = vld [vmem:[%s3 + $0xb8] sm:$0xff]
    %v131 = vld [vmem:[%s3 + $0xc0] sm:$0xff]
    %v132 = vld [vmem:[%s3 + $0xc8] sm:$0xff]
    %v133 = vld [vmem:[%s3 + $0xd0] sm:$0xff]
    %v134 = vld [vmem:[%s3 + $0xd8] sm:$0xff]
    %v135 = vld [vmem:[%s3 + $0xe0] sm:$0xff]
    %v136 = vld [vmem:[%s3 + $0xe8] sm:$0xff]
    %v137 = vld [vmem:[%s3 + $0xf0] sm:$0xff]
    %v138 = vld [vmem:[%s3 + $0xf8] sm:$0xff]
    %v139 = vld [vmem:[%s3 + $0x100] sm:$0xff]
    %v140 = vld [vmem:[%s3 + $0x108] sm:$0xff]
    %v141 = vld [vmem:[%s3 + $0x110] sm:$0xff]
    %v142 = vld [vmem:[%s3 + $0x118] sm:$0xff]
    %v143 = vld [vmem:[%s3 + $0x120] sm:$0xff]
    %v144 = vld [vmem:[%s3 + $0x128] sm:$0xff]
    %v145 = vld [vmem:[%s3 + $0x130] sm:$0xff]
    %v146 = vld [vmem:[%s3 + $0x138] sm:$0xff]
    %v147 = vld [vmem:[%s3 + $0x140] sm:$0xff]
    %v148 = vld [vmem:[%s3 + $0x148] sm:$0xff]
    %v149 = vld [vmem:[%s3 + $0x150] sm:$0xff]
    %v150 = vld [vmem:[%s3 + $0x158] sm:$0xff]
    %v151 = vld [vmem:[%s3 + $0x160] sm:$0xff]
    %v152 = vld [vmem:[%s3 + $0x168] sm:$0xff]
    %v153 = vld [vmem:[%s3 + $0x170] sm:$0xff]
    %v154 = vld [vmem:[%s3 + $0x178] sm:$0xff]
    %v155 = vld [vmem:[%s3 + $0x180] sm:$0xff]
    %v156 = vld [vmem:[%s3 + $0x188] sm:$0xff]
    %v157 = vld [vmem:[%s3 + $0x190] sm:$0xff]
    %v158 = vld [vmem:[%s3 + $0x198] sm:$0xff]
    %v159 = vld [vmem:[%s3 + $0x1a0] sm:$0xff]
    %v160 = vld [vmem:[%s3 + $0x1a8] sm:$0xff]
    %v161 = vld [vmem:[%s3 + $0x1b0] sm:$0xff]
    %v162 = vld [vmem:[%s3 + $0x1b8] sm:$0xff]
    %v163 = vld [vmem:[%s3 + $0x1c0] sm:$0xff]
    %v164 = vld [vmem:[%s3 + $0x1c8] sm:$0xff]
    %v165 = vld [vmem:[%s3 + $0x1d0] sm:$0xff]
    %v166 = vld [vmem:[%s3 + $0x1d8] sm:$0xff]
    %v167 = vld [vmem:[%s3 + $0x1e0] sm:$0xff]
    %v168 = vld [vmem:[%s3 + $0x1e8] sm:$0xff]
    %v169 = vld [vmem:[%s3 + $0x1f0] sm:$0xff]
    %v170 = vld [vmem:[%s3 + $0x1f8] sm:$0xff]
    %v171 = vld [vmem:[%s3 + $0x200] sm:$0xff]
    %v172 = vld [vmem:[%s3 + $0x208] sm:$0xff]
    %v173 = vld [vmem:[%s3 + $0x210] sm:$0xff]
    %v174 = vld [vmem:[%s3 + $0x218] sm:$0xff]
    %v175 = vld [vmem:[%s3 + $0x220] sm:$0xff]
    %v176 = vld [vmem:[%s3 + $0x228] sm:$0xff]
    %v177 = vld [vmem:[%s3 + $0x230] sm:$0xff]
    %v178 = vld [vmem:[%s3 + $0x238] sm:$0xff]
    %v179 = vld [vmem:[%s3 + $0x240] sm:$0xff]
    %v180 = vld [vmem:[%s3 + $0x248] sm:$0xff]
    %v181 = vld [vmem:[%s3 + $0x250] sm:$0xff]
    %v182 = vld [vmem:[%s3 + $0x258] sm:$0xff]
    %v183 = vld [vmem:[%s3 + $0x260] sm:$0xff]
    %v184 = vld [vmem:[%s3 + $0x268] sm:$0xff]
    %v185 = vld [vmem:[%s3 + $0x270] sm:$0xff]
    %v186 = vld [vmem:[%s3 + $0x278] sm:$0xff]
    %v187 = vld [vmem:[%s3 + $0x280] sm:$0xff]
    %v188 = vld [vmem:[%s3 + $0x288] sm:$0xff]
    %v189 = vld [vmem:[%s3 + $0x290] sm:$0xff]
    %v190 = vld [vmem:[%s3 + $0x298] sm:$0xff]
    %v191 = vld [vmem:[%s3 + $0x2a0] sm:$0xff]
    %v192 = vld [vmem:[%s3 + $0x2a8] sm:$0xff]
    %v193 = vld [vmem:[%s3 + $0x2b0] sm:$0xff]
    %v194 = vld [vmem:[%s3 + $0x2b8] sm:$0xff]
    %v195 = vld [vmem:[%s3 + $0x2c0] sm:$0xff]
    %v196 = vld [vmem:[%s3 + $0x2c8] sm:$0xff]
    %v197 = vld [vmem:[%s3 + $0x2d0] sm:$0xff]
    %v198 = vld [vmem:[%s3 + $0x2d8] sm:$0xff]
    %v199 = vld [vmem:[%s3 + $0x2e0] sm:$0xff]
    %v200 = vld [vmem:[%s3 + $0x2e8] sm:$0xff]
    %v201 = vld [vmem:[%s3 + $0x2f0] sm:$0xff]
    %v202 = vld [vmem:[%s3 + $0x2f8] sm:$0xff]
    %v203 = vld [vmem:[%s3 + $0x300] sm:$0xff]
    %v204 = vld [vmem:[%s3 + $0x308] sm:$0xff]
    %v205 = vld [vmem:[%s3 + $0x310] sm:$0xff]
    %v206 = vld [vmem:[%s3 + $0x318] sm:$0xff]
    %v207 = vld [vmem:[%s3 + $0x320] sm:$0xff]
    %v208 = vld [vmem:[%s3 + $0x328] sm:$0xff]
    %v209 = vld [vmem:[%s3 + $0x330] sm:$0xff]
    %v210 = vld [vmem:[%s3 + $0x338] sm:$0xff]
    %v211 = vld [vmem:[%s3 + $0x340] sm:$0xff]
    %v212 = vld [vmem:[%s3 + $0x348] sm:$0xff]
    %v213 = vld [vmem:[%s3 + $0x350] sm:$0xff]
    %v214 = vld [vmem:[%s3 + $0x358] sm:$0xff]
    %v215 = vld [vmem:[%s3 + $0x360] sm:$0xff]
    %v216 = vld [vmem:[%s3 + $0x368] sm:$0xff]
    %v217 = vld [vmem:[%s3 + $0x370] sm:$0xff]
    %v218 = vld [vmem:[%s3 + $0x378] sm:$0xff]
    %v219 = vld [vmem:[%s4] sm:$0x7f]
    %v221 = vlaneseq
    %v222 = vshrl.u32 %v221, 7
    %v223 = vsub.s32 0, %v222
    %v224 = vrot.slane %v219, %v223
    %v225 = vlaneseq
    %v226 = vshrl.u32 %v225, 7
    %v227 = vsub.s32 1, %v226
    %v228 = vrot.slane %v219, %v227
    %v229 = vlaneseq
    %v230 = vshrl.u32 %v229, 7
    %v231 = vsub.s32 2, %v230
    %v232 = vrot.slane %v219, %v231
    %v233 = vlaneseq
    %v234 = vshrl.u32 %v233, 7
    %v235 = vsub.s32 3, %v234
    %v236 = vrot.slane %v219, %v235
    %v237 = vlaneseq
    %v238 = vshrl.u32 %v237, 7
    %v239 = vsub.s32 4, %v238
    %v240 = vrot.slane %v219, %v239
    %v241 = vlaneseq
    %v242 = vshrl.u32 %v241, 7
    %v243 = vsub.s32 5, %v242
    %v244 = vrot.slane %v219, %v243
    %v245 = vlaneseq
    %v246 = vshrl.u32 %v245, 7
    %v247 = vsub.s32 6, %v246
    %v248 = vrot.slane %v219, %v247
    %256 = vmatprep.subr.mxu0 %v213
    %257 = vmatpush1.msra.mxu0 %v212
    %258 = vmatprep.subr.mxu0 %v206
    %259 = vmatpush1.msra.mxu0 %v205
    %260 = vmatprep.subr.mxu0 %v199
    %261 = vmatpush1.msra.mxu0 %v198
    %262 = vmatprep.subr.mxu0 %v192
    %263 = vmatpush1.msra.mxu0 %v191
    %264 = vmatprep.subr.mxu0 %v185
    %265 = vmatpush1.msra.mxu0 %v184
    %266 = vmatprep.subr.mxu0 %v178
    %267 = vmatpush1.msra.mxu0 %v177
    %268 = vmatprep.subr.mxu0 %v171
    %269 = vmatpush1.msra.mxu0 %v170
    %270 = vmatprep.subr.mxu0 %v164
    %271 = vmatpush1.msra.mxu0 %v163
    %272 = vmatprep.subr.mxu0 %v157
    %273 = vmatpush1.msra.mxu0 %v156
    %274 = vmatprep.subr.mxu0 %v150
    %275 = vmatpush1.msra.mxu0 %v149
    %276 = vmatprep.subr.mxu0 %v143
    %277 = vmatpush1.msra.mxu0 %v142
    %278 = vmatprep.subr.mxu0 %v136
    %279 = vmatpush1.msra.mxu0 %v135
    %280 = vmatprep.subr.mxu0 %v129
    %281 = vmatpush1.msra.mxu0 %v128
    %282 = vmatprep.subr.mxu0 %v122
    %283 = vmatpush1.msra.mxu0 %v121
    %284 = vmatprep.subr.mxu0 %v115
    %285 = vmatpush1.msra.mxu0 %v114
    %286 = vmatprep.subr.mxu0 %v108
    %287 = vmatpush1.msra.mxu0 %v107
    %288 = vmatprep.subr.mxu0 0.0
    %289 = vmatpush2.msra.mxu0 0.0
    %290 = vmatprep.subr.mxu0 0.0
    %291 = vmatpush2.msra.mxu0 0.0
    %292 = vmatprep.subr.mxu0 0.0
    %293 = vmatpush2.msra.mxu0 0.0
    %294 = vmatprep.subr.mxu0 0.0
    %295 = vmatpush2.msra.mxu0 0.0
    %296 = vmatprep.subr.mxu0 0.0
    %297 = vmatpush2.msra.mxu0 0.0
    %298 = vmatprep.subr.mxu0 0.0
    %299 = vmatpush2.msra.mxu0 0.0
    %300 = vmatprep.subr.mxu0 0.0
    %301 = vmatpush2.msra.mxu0 0.0
    %302 = vmatprep.subr.mxu0 0.0
    %303 = vmatpush2.msra.mxu0 0.0
    %304 = vmatprep.subr.mxu0 0.0
    %305 = vmatpush2.msra.mxu0 0.0
    %306 = vmatprep.subr.mxu0 0.0
    %307 = vmatpush2.msra.mxu0 0.0
    %308 = vmatprep.subr.mxu0 0.0
    %309 = vmatpush2.msra.mxu0 0.0
    %310 = vmatprep.subr.mxu0 0.0
    %311 = vmatpush2.msra.mxu0 0.0
    %312 = vmatprep.subr.mxu0 0.0
    %313 = vmatpush2.msra.mxu0 0.0
    %314 = vmatprep.subr.mxu0 0.0
    %315 = vmatpush2.msra.mxu0 0.0
    %316 = vmatprep.subr.mxu0 0.0
    %317 = vmatpush2.msra.mxu0 0.0
    %318 = vmatprep.subr.mxu0 0.0
    %319 = vmatpush2.msra.mxu0 0.0
    %320 = vmatprep.mubr.f32.mxu0 0.0
    %321 = vmatmul.mubr.f32.gmra.mxu0 %v106
    %v322 = vpop.f32.mrf.mxu0
    %v323 = vadd.f32 %v224, %v322
    %v324 = vpop.f32.mrf.mxu0
    %v325 = vadd.f32 %v228, %v324
    %326 = vdwg.mxu0
    %327 = vmatprep.subr.mxu0 %v215
    %328 = vmatpush1.msra.mxu0 %v214
    %329 = vmatprep.subr.mxu0 %v208
    %330 = vmatpush1.msra.mxu0 %v207
    %331 = vmatprep.subr.mxu0 %v201
    %332 = vmatpush1.msra.mxu0 %v200
    %333 = vmatprep.subr.mxu0 %v194
    %334 = vmatpush1.msra.mxu0 %v193
    %335 = vmatprep.subr.mxu0 %v187
    %336 = vmatpush1.msra.mxu0 %v186
    %337 = vmatprep.subr.mxu0 %v180
    %338 = vmatpush1.msra.mxu0 %v179
    %339 = vmatprep.subr.mxu0 %v173
    %340 = vmatpush1.msra.mxu0 %v172
    %341 = vmatprep.subr.mxu0 %v166
    %342 = vmatpush1.msra.mxu0 %v165
    %343 = vmatprep.subr.mxu0 %v159
    %344 = vmatpush1.msra.mxu0 %v158
    %345 = vmatprep.subr.mxu0 %v152
    %346 = vmatpush1.msra.mxu0 %v151
    %347 = vmatprep.subr.mxu0 %v145
    %348 = vmatpush1.msra.mxu0 %v144
    %349 = vmatprep.subr.mxu0 %v138
    %350 = vmatpush1.msra.mxu0 %v137
    %351 = vmatprep.subr.mxu0 %v131
    %352 = vmatpush1.msra.mxu0 %v130
    %353 = vmatprep.subr.mxu0 %v124
    %354 = vmatpush1.msra.mxu0 %v123
    %355 = vmatprep.subr.mxu0 %v117
    %356 = vmatpush1.msra.mxu0 %v116
    %357 = vmatprep.subr.mxu0 %v110
    %358 = vmatpush1.msra.mxu0 %v109
    %359 = vmatprep.subr.mxu0 0.0
    %360 = vmatpush2.msra.mxu0 0.0
    %361 = vmatprep.subr.mxu0 0.0
    %362 = vmatpush2.msra.mxu0 0.0
    %363 = vmatprep.subr.mxu0 0.0
    %364 = vmatpush2.msra.mxu0 0.0
    %365 = vmatprep.subr.mxu0 0.0
    %366 = vmatpush2.msra.mxu0 0.0
    %367 = vmatprep.subr.mxu0 0.0
    %368 = vmatpush2.msra.mxu0 0.0
    %369 = vmatprep.subr.mxu0 0.0
    %370 = vmatpush2.msra.mxu0 0.0
    %371 = vmatprep.subr.mxu0 0.0
    %372 = vmatpush2.msra.mxu0 0.0
    %373 = vmatprep.subr.mxu0 0.0
    %374 = vmatpush2.msra.mxu0 0.0
    %375 = vmatprep.subr.mxu0 0.0
    %376 = vmatpush2.msra.mxu0 0.0
    %377 = vmatprep.subr.mxu0 0.0
    %378 = vmatpush2.msra.mxu0 0.0
    %379 = vmatprep.subr.mxu0 0.0
    %380 = vmatpush2.msra.mxu0 0.0
    %381 = vmatprep.subr.mxu0 0.0
    %382 = vmatpush2.msra.mxu0 0.0
    %383 = vmatprep.subr.mxu0 0.0
    %384 = vmatpush2.msra.mxu0 0.0
    %385 = vmatprep.subr.mxu0 0.0
    %386 = vmatpush2.msra.mxu0 0.0
    %387 = vmatprep.subr.mxu0 0.0
    %388 = vmatpush2.msra.mxu0 0.0
    %389 = vmatprep.subr.mxu0 0.0
    %390 = vmatpush2.msra.mxu0 0.0
    %391 = vmatprep.mubr.f32.mxu0 0.0
    %392 = vmatmul.mubr.f32.gmra.mxu0 %v106
    %v393 = vpop.f32.mrf.mxu0
    %v394 = vadd.f32 %v232, %v393
    %v395 = vpop.f32.mrf.mxu0
    %v396 = vadd.f32 %v236, %v395
    %397 = vdwg.mxu0
    %398 = vmatprep.subr.mxu0 %v217
    %399 = vmatpush1.msra.mxu0 %v216
    %400 = vmatprep.subr.mxu0 %v210
    %401 = vmatpush1.msra.mxu0 %v209
    %402 = vmatprep.subr.mxu0 %v203
    %403 = vmatpush1.msra.mxu0 %v202
    %404 = vmatprep.subr.mxu0 %v196
    %405 = vmatpush1.msra.mxu0 %v195
    %406 = vmatprep.subr.mxu0 %v189
    %407 = vmatpush1.msra.mxu0 %v188
    %408 = vmatprep.subr.mxu0 %v182
    %409 = vmatpush1.msra.mxu0 %v181
    %410 = vmatprep.subr.mxu0 %v175
    %411 = vmatpush1.msra.mxu0 %v174
    %412 = vmatprep.subr.mxu0 %v168
    %413 = vmatpush1.msra.mxu0 %v167
    %414 = vmatprep.subr.mxu0 %v161
    %415 = vmatpush1.msra.mxu0 %v160
    %416 = vmatprep.subr.mxu0 %v154
    %417 = vmatpush1.msra.mxu0 %v153
    %418 = vmatprep.subr.mxu0 %v147
    %419 = vmatpush1.msra.mxu0 %v146
    %420 = vmatprep.subr.mxu0 %v140
    %421 = vmatpush1.msra.mxu0 %v139
    %422 = vmatprep.subr.mxu0 %v133
    %423 = vmatpush1.msra.mxu0 %v132
    %424 = vmatprep.subr.mxu0 %v126
    %425 = vmatpush1.msra.mxu0 %v125
    %426 = vmatprep.subr.mxu0 %v119
    %427 = vmatpush1.msra.mxu0 %v118
    %428 = vmatprep.subr.mxu0 %v112
    %429 = vmatpush1.msra.mxu0 %v111
    %430 = vmatprep.subr.mxu0 0.0
    %431 = vmatpush2.msra.mxu0 0.0
    %432 = vmatprep.subr.mxu0 0.0
    %433 = vmatpush2.msra.mxu0 0.0
    %434 = vmatprep.subr.mxu0 0.0
    %435 = vmatpush2.msra.mxu0 0.0
    %436 = vmatprep.subr.mxu0 0.0
    %437 = vmatpush2.msra.mxu0 0.0
    %438 = vmatprep.subr.mxu0 0.0
    %439 = vmatpush2.msra.mxu0 0.0
    %440 = vmatprep.subr.mxu0 0.0
    %441 = vmatpush2.msra.mxu0 0.0
    %442 = vmatprep.subr.mxu0 0.0
    %443 = vmatpush2.msra.mxu0 0.0
    %444 = vmatprep.subr.mxu0 0.0
    %445 = vmatpush2.msra.mxu0 0.0
    %446 = vmatprep.subr.mxu0 0.0
    %447 = vmatpush2.msra.mxu0 0.0
    %448 = vmatprep.subr.mxu0 0.0
    %449 = vmatpush2.msra.mxu0 0.0
    %450 = vmatprep.subr.mxu0 0.0
    %451 = vmatpush2.msra.mxu0 0.0
    %452 = vmatprep.subr.mxu0 0.0
    %453 = vmatpush2.msra.mxu0 0.0
    %454 = vmatprep.subr.mxu0 0.0
    %455 = vmatpush2.msra.mxu0 0.0
    %456 = vmatprep.subr.mxu0 0.0
    %457 = vmatpush2.msra.mxu0 0.0
    %458 = vmatprep.subr.mxu0 0.0
    %459 = vmatpush2.msra.mxu0 0.0
    %460 = vmatprep.subr.mxu0 0.0
    %461 = vmatpush2.msra.mxu0 0.0
    %462 = vmatprep.mubr.f32.mxu0 0.0
    %463 = vmatmul.mubr.f32.gmra.mxu0 %v106
    %v464 = vpop.f32.mrf.mxu0
    %v465 = vadd.f32 %v240, %v464
    %v466 = vpop.f32.mrf.mxu0
    %v467 = vadd.f32 %v244, %v466
    %468 = vdwg.mxu0
    %469 = vmatprep.subr.mxu0 0.0
    %470 = vmatpush1.msra.mxu0 %v218
    %471 = vmatprep.subr.mxu0 0.0
    %472 = vmatpush1.msra.mxu0 %v211
    %473 = vmatprep.subr.mxu0 0.0
    %474 = vmatpush1.msra.mxu0 %v204
    %475 = vmatprep.subr.mxu0 0.0
    %476 = vmatpush1.msra.mxu0 %v197
    %477 = vmatprep.subr.mxu0 0.0
    %478 = vmatpush1.msra.mxu0 %v190
    %479 = vmatprep.subr.mxu0 0.0
    %480 = vmatpush1.msra.mxu0 %v183
    %481 = vmatprep.subr.mxu0 0.0
    %482 = vmatpush1.msra.mxu0 %v176
    %483 = vmatprep.subr.mxu0 0.0
    %484 = vmatpush1.msra.mxu0 %v169
    %485 = vmatprep.subr.mxu0 0.0
    %486 = vmatpush1.msra.mxu0 %v162
    %487 = vmatprep.subr.mxu0 0.0
    %488 = vmatpush1.msra.mxu0 %v155
    %489 = vmatprep.subr.mxu0 0.0
    %490 = vmatpush1.msra.mxu0 %v148
    %491 = vmatprep.subr.mxu0 0.0
    %492 = vmatpush1.msra.mxu0 %v141
    %493 = vmatprep.subr.mxu0 0.0
    %494 = vmatpush1.msra.mxu0 %v134
    %495 = vmatprep.subr.mxu0 0.0
    %496 = vmatpush1.msra.mxu0 %v127
    %497 = vmatprep.subr.mxu0 0.0
    %498 = vmatpush1.msra.mxu0 %v120
    %499 = vmatprep.subr.mxu0 0.0
    %500 = vmatpush1.msra.mxu0 %v113
    %501 = vmatprep.subr.mxu0 0.0
    %502 = vmatpush2.msra.mxu0 0.0
    %503 = vmatprep.subr.mxu0 0.0
    %504 = vmatpush2.msra.mxu0 0.0
    %505 = vmatprep.subr.mxu0 0.0
    %506 = vmatpush2.msra.mxu0 0.0
    %507 = vmatprep.subr.mxu0 0.0
    %508 = vmatpush2.msra.mxu0 0.0
    %509 = vmatprep.subr.mxu0 0.0
    %510 = vmatpush2.msra.mxu0 0.0
    %511 = vmatprep.subr.mxu0 0.0
    %512 = vmatpush2.msra.mxu0 0.0
    %513 = vmatprep.subr.mxu0 0.0
    %514 = vmatpush2.msra.mxu0 0.0
    %515 = vmatprep.subr.mxu0 0.0
    %516 = vmatpush2.msra.mxu0 0.0
    %517 = vmatprep.subr.mxu0 0.0
    %518 = vmatpush2.msra.mxu0 0.0
    %519 = vmatprep.subr.mxu0 0.0
    %520 = vmatpush2.msra.mxu0 0.0
    %521 = vmatprep.subr.mxu0 0.0
    %522 = vmatpush2.msra.mxu0 0.0
    %523 = vmatprep.subr.mxu0 0.0
    %524 = vmatpush2.msra.mxu0 0.0
    %525 = vmatprep.subr.mxu0 0.0
    %526 = vmatpush2.msra.mxu0 0.0
    %527 = vmatprep.subr.mxu0 0.0
    %528 = vmatpush2.msra.mxu0 0.0
    %529 = vmatprep.subr.mxu0 0.0
    %530 = vmatpush2.msra.mxu0 0.0
    %531 = vmatprep.subr.mxu0 0.0
    %532 = vmatpush2.msra.mxu0 0.0
    %533 = vmatprep.mubr.f32.mxu0 0.0
    %534 = vmatmul.mubr.f32.gmra.mxu0 %v106
    %v535 = vpop.f32.mrf.mxu0
    %v536 = vadd.f32 %v248, %v535
    %v537 = vpop.f32.mrf.mxu0
    %538 = vdwg.mxu0
    %v539 = vmul.f32 %v323, 0.01
    %v540 = vmul.f32 %v325, 0.01
    %v541 = vmul.f32 %v394, 0.01
    %v542 = vmul.f32 %v396, 0.01
    %v543 = vmul.f32 %v465, 0.01
    %v544 = vmul.f32 %v467, 0.01
    %v545 = vmul.f32 %v536, 0.01
    %v546 = vmax.f32 %v323, %v539
    %v547 = vmax.f32 %v325, %v540
    %v548 = vmax.f32 %v394, %v541
    %v549 = vmax.f32 %v396, %v542
    %v550 = vmax.f32 %v465, %v543
    %v551 = vmax.f32 %v467, %v544
    %v552 = vmax.f32 %v536, %v545
    %553 = vst [vmem:[#allocation2] sm:$0xff] %v546
    %554 = vst [vmem:[#allocation2 + $0x8] sm:$0xff] %v547
    %555 = vst [vmem:[#allocation2 + $0x10] sm:$0xff] %v548
    %556 = vst [vmem:[#allocation2 + $0x18] sm:$0xff] %v549
    %557 = vst [vmem:[#allocation2 + $0x20] sm:$0xff] %v550
    %558 = vst [vmem:[#allocation2 + $0x28] sm:$0xff] %v551
    %559 = vst.msk [vmem:[#allocation2 + $0x30] sm:$0xff] %vm31, %v552
    // Predicated region
    $region22: #{tpu_custom_call.1} parent=1 // pred_check
      _
    $region23: #{tpu_custom_call.1} parent=1 // pred_check_branch
      %561 = sbr.rel (0) target = $region25
    $region24: #{tpu_custom_call.1} parent=1 // pred_region
      %s563 = ssub.s32 896, 896
      %564 = vsyncadd [#allocation3], %s563
      %s566 = sshll.u32 [#allocation2], 4
      %s567 = int_to_ptr.vmem [resolvable:$true] %s566
      %569 = dma.vmem_to_hbm [thread:$0]  %s567, 896, %s5, [#allocation3]
    $region25: #{tpu_custom_call.1} parent=1 // pred_fallthru
      _
    // Predicated region
    $region26: #{tpu_custom_call.1} parent=1 // pred_check
      _
    $region27: #{tpu_custom_call.1} parent=1 // pred_check_branch
      %571 = sbr.rel (0) target = $region29
    $region28: #{tpu_custom_call.1} parent=1 // pred_region
      %572 = dma.done [#allocation3], 896
    $region29: #{tpu_custom_call.1} parent=1 // pred_fallthru
      _
    %573 = vsyncpa [#allocation3], 1

</llo_original>
